<compile_context>
chip_gen: v7x
topology: tpu7x:2x2x1
jax: 0.10.0
libtpu: 0.0.40
codegen_flags: <defaults>
</compile_context>

<pallas_src>
import functools

import jax
import jax.numpy as jnp
from jax.experimental import pallas as pl
from jax.experimental.pallas import tpu as pltpu


def _round_up(x, m):
    return (x + m - 1) // m * m


def _cdiv(a, b):
    return -(-a // b)


def _num_tensorcores():
    """Best-effort TensorCore count (2 on v7x); defaults to 1 if unknown."""
    try:
        info = pltpu.get_tpu_info()
        for name in ("num_cores", "core_count", "num_tensorcores", "tensorcore_count"):
            v = getattr(info, name, None)
            if isinstance(v, int) and v > 0:
                return v
    except Exception:
        pass
    try:
        v = getattr(jax.devices()[0], "num_cores", None)
        if isinstance(v, int) and v > 0:
            return v
    except Exception:
        pass
    return 1


def _pick_reduction_tile(n, cap=8192):
    """Multiple-of-128 reduction tile in [128, cap].

    If round_up(n, 128) fits under `cap`, one reduction step covers it all;
    otherwise split into the fewest near-equal lane-dense tiles.  The ragged
    tail of the last tile is masked inside the kernel (never padded on host).
    """
    n128 = _round_up(n, 128)
    if n128 <= cap:
        return n128
    steps = _cdiv(n128, cap)
    return _round_up(_cdiv(n128, steps), 128)


def _fold_lanes_128(x):
    """Sum the 128-wide lane-column tiles of x: (TB, G*128) -> (TB, 128).

    Static lane-aligned slices are vreg subsets (no relayout); the adds are
    pure VPU work, so nothing touches the XLU until the final reduce.
    """
    g = x.shape[-1] // 128
    out = x[:, 0:128]
    for j in range(1, g):
        out = out + x[:, j * 128:(j + 1) * 128]
    return out


def _l2dist_kernel(adv_ref, ori_ref, w_ref, out_ref, acc_ref, *, n_valid, tn,
                   needs_mask):
    # adv_ref/ori_ref: (TB, TN) native dtype; w_ref/out_ref: (TB, 1) f32;
    # acc_ref: (TB, 128) f32 lane-dense accumulator, resident across the
    # reduction grid axis.
    k = pl.program_id(1)
    last = pl.num_programs(1) - 1

    @pl.when(k == 0)
    def _():
        acc_ref[...] = jnp.zeros_like(acc_ref)

    # Subtract in the native dtype, cast the diff once (saves a VALU cast per
    # element for bf16/f16 inputs on v6e/v7x; exact no-op for f32 inputs).
    # TODO(synk): on v5e (no bf16 VALU) a cast-both-operands-first path may
    # lower slightly better for sub-32-bit inputs.
    diff = (adv_ref[...] - ori_ref[...]).astype(jnp.float32)
    d2 = diff * diff

    if needs_mask:
        @pl.when(k == last)
        def _():
            col = jax.lax.broadcasted_iota(jnp.int32, d2.shape, 1)
            valid = (k * tn + col) < n_valid
            acc_ref[...] += _fold_lanes_128(jnp.where(valid, d2, 0.0))

        @pl.when(k != last)
        def _():
            acc_ref[...] += _fold_lanes_128(d2)
    else:
        acc_ref[...] += _fold_lanes_128(d2)

    @pl.when(k == last)
    def _():
        # One cross-lane reduce per batch tile (instead of per reduction step).
        total = jnp.sum(acc_ref[...], axis=1, keepdims=True)
        out_ref[...] = jnp.sqrt(total) * w_ref[...]


def l2_dist(adv_pc, ori_pc, weights=None, batch_avg=True):
    """Pallas implementation of L2Dist.forward.

    adv_pc, ori_pc: [B, K, 3] or [B, 3, K] (the reduction covers both trailing
    dims, so either layout gives the same result).  weights: [B] or None.
    """
    B = adv_pc.shape[0]
    if weights is None:
        weights = jnp.ones((B,), dtype=jnp.float32)
    weights = weights.astype(jnp.float32).reshape(B, 1)

    # Flatten reduced dims; keep the native dtype (cast happens in-kernel).
    adv2d = adv_pc.reshape(B, -1)
    ori2d = ori_pc.reshape(B, -1)
    N = adv2d.shape[1]
    itemsize = jnp.dtype(adv2d.dtype).itemsize

    # ---- tiling -------------------------------------------------------------
    TN = _pick_reduction_tile(N)                    # large, lane-dense, few steps
    pack = {1: 32, 2: 16}.get(itemsize, 8)          # sublane packing of the dtype

    if B <= pack:
        TB = B                                      # full-dim block for tiny batch
    else:
        target_block_bytes = 2 << 20                # ~2 MiB per input block
        TB = max(pack, (target_block_bytes // (TN * itemsize)) // pack * pack)
        TB = min(TB, (B // pack) * pack)            # pack-aligned, never > B
        # v7x megacore: keep >= 2 entries on the "parallel" batch axis so both
        # TensorCores stream HBM; skipped on 1-TC chips (v5e/v6e).
        if _num_tensorcores() >= 2:
            while _cdiv(B, TB) < 2 and TB > pack:
                TB = max(pack, (TB // 2) // pack * pack)
        # TODO(synk): for very small B on v7x, split the reduction axis across
        # the two cores instead (partial sums per half, add+sqrt in XLA).

    grid = (_cdiv(B, TB), _cdiv(N, TN))
    Bp = grid[0] * TB
    needs_mask = (N % TN) != 0

    # Only the tiny weights vector is ever padded; the point clouds stream
    # unpadded (ragged tails handled by edge blocks + in-kernel lane mask).
    if Bp != B:
        weights = jnp.pad(weights, ((0, Bp - B), (0, 0)))

    # Explicit VMEM budget: 2 inputs x 2 pipeline buffers x block, plus the
    # lane-dense accumulator and small out/weight blocks, plus headroom.
    block_bytes = TB * TN * itemsize
    vmem_need = 4 * block_bytes + TB * 128 * 4 + 4 * (TB * 4) + (2 << 20)
    vmem_limit = int(min(max(vmem_need, 16 << 20), 64 << 20))

    kernel = functools.partial(_l2dist_kernel, n_valid=N, tn=TN,
                               needs_mask=needs_mask)

    dist2d = pl.pallas_call(
        kernel,
        out_shape=jax.ShapeDtypeStruct((Bp, 1), jnp.float32),
        grid_spec=pltpu.PrefetchScalarGridSpec(
            num_scalar_prefetch=0,
            grid=grid,
            in_specs=[
                pl.BlockSpec((TB, TN), lambda i, k: (i, k)),
                pl.BlockSpec((TB, TN), lambda i, k: (i, k)),
                pl.BlockSpec((TB, 1), lambda i, k: (i, 0)),
            ],
            out_specs=pl.BlockSpec((TB, 1), lambda i, k: (i, 0)),
            scratch_shapes=[pltpu.VMEM((TB, 128), jnp.float32)],
        ),
        compiler_params=pltpu.CompilerParams(
            dimension_semantics=("parallel", "arbitrary"),
            vmem_limit_bytes=vmem_limit),
        cost_estimate=pl.CostEstimate(
            flops=3 * B * N,
            transcendentals=B,
            bytes_accessed=2 * B * N * itemsize + 8 * Bp),
    )(adv2d, ori2d, weights)

    dist = dist2d[:B, 0]                 # drop edge-block rows BEFORE the mean
    if batch_avg:
        # Batch mean kept as a (tiny) XLA reduce outside the kernel.
        return jnp.mean(dist)
    return dist


if __name__ == "__main__":
    key = jax.random.PRNGKey(0)
    k1, k2, k3 = jax.random.split(key, 3)

    # Small test: single-block grid, ragged lane tail (N = 48) masked in-kernel.
    B, K = 2, 16
    adv_pc = jax.random.normal(k1, (B, K, 3), dtype=jnp.float32)
    ori_pc = jax.random.normal(k2, (B, K, 3), dtype=jnp.float32)
    weights = jax.random.uniform(k3, (B,), dtype=jnp.float32)

    out_avg = jax.block_until_ready(l2_dist(adv_pc, ori_pc, weights, batch_avg=True))
    out_vec = jax.block_until_ready(l2_dist(adv_pc, ori_pc, None, batch_avg=False))

    ref_vec_w = jnp.sqrt(jnp.sum((adv_pc - ori_pc) ** 2, axis=(1, 2))) * weights
    ref_avg = jnp.mean(ref_vec_w)
    ref_vec = jnp.sqrt(jnp.sum((adv_pc - ori_pc) ** 2, axis=(1, 2)))

    assert jnp.allclose(out_avg, ref_avg, rtol=1e-5, atol=1e-5)
    assert jnp.allclose(out_vec, ref_vec, rtol=1e-5, atol=1e-5)

    # Second test: multi-step reduction grid (N = 9000 -> two 4608-lane tiles)
    # exercising the in-kernel tail mask; no host-side padding of the inputs.
    k4, k5, k6 = jax.random.split(jax.random.PRNGKey(1), 3)
    B2, K2 = 5, 3000
    adv2 = jax.random.normal(k4, (B2, K2, 3), dtype=jnp.float32)
    ori2 = jax.random.normal(k5, (B2, K2, 3), dtype=jnp.float32)
    w2 = jax.random.uniform(k6, (B2,), dtype=jnp.float32)

    out2 = jax.block_until_ready(l2_dist(adv2, ori2, w2, batch_avg=False))
    ref2 = jnp.sqrt(jnp.sum((adv2 - ori2) ** 2, axis=(1, 2))) * w2
    assert jnp.allclose(out2, ref2, rtol=1e-5, atol=1e-4)

    print("KERNEL_OK")
</pallas_src>

<mosaic_0001>
module attributes {stable_mosaic.version = 11 : i64} {
  func.func @_l2dist_kernel(%arg0: i32, %arg1: i32, %arg2: memref<2x128xf32, #tpu.memory_space<vmem>>, %arg3: memref<2x128xf32, #tpu.memory_space<vmem>>, %arg4: memref<2x1xf32, #tpu.memory_space<vmem>>, %arg5: memref<2x1xf32, #tpu.memory_space<vmem>>, %arg6: memref<2x128xf32, #tpu.memory_space<vmem>>) attributes {dimension_semantics = [#tpu.dimension_semantics<parallel>, #tpu.dimension_semantics<arbitrary>], iteration_bounds = array<i64: 1, 1>, scalar_prefetch = 0 : i64, scratch_operands = 1 : i64, tpu.core_type = #tpu.core_type<tc>, window_params = [{transform_indices = @transform_0, window_bounds = array<i64: 2, 128>}, {transform_indices = @transform_1, window_bounds = array<i64: 2, 128>}, {transform_indices = @transform_2, window_bounds = array<i64: 2, 1>}, {transform_indices = @transform_3, window_bounds = array<i64: 2, 1>}]} {
    %c0_i32 = arith.constant 0 : i32
    %0 = arith.cmpi eq, %arg1, %c0_i32 : i32
    %1 = arith.extui %0 : i1 to i32
    %c0_i32_0 = arith.constant 0 : i32
    %2 = arith.cmpi ne, %1, %c0_i32_0 : i32
    scf.if %2 {
      %cst = arith.constant 0.000000e+00 : f32
      %16 = vector.broadcast %cst : f32 to vector<2x128xf32>
      %c0_10 = arith.constant 0 : index
      %c0_11 = arith.constant 0 : index
      %17 = vector.load %arg6[%c0_10, %c0_11] : memref<2x128xf32, #tpu.memory_space<vmem>>, vector<2x128xf32>
      tpu.vector_store %arg6[%c0_10, %c0_11], %16 {strides = array<i32>} : memref<2x128xf32, #tpu.memory_space<vmem>>, vector<2x128xf32>,
    } else {
    }
    %c0 = arith.constant 0 : index
    %c0_1 = arith.constant 0 : index
    %3 = vector.load %arg2[%c0, %c0_1] : memref<2x128xf32, #tpu.memory_space<vmem>>, vector<2x128xf32>
    %c0_2 = arith.constant 0 : index
    %c0_3 = arith.constant 0 : index
    %4 = vector.load %arg3[%c0_2, %c0_3] : memref<2x128xf32, #tpu.memory_space<vmem>>, vector<2x128xf32>
    %5 = arith.subf %3, %4 : vector<2x128xf32>
    %6 = arith.mulf %5, %5 : vector<2x128xf32>
    %c0_i32_4 = arith.constant 0 : i32
    %7 = arith.cmpi eq, %arg1, %c0_i32_4 : i32
    %8 = arith.extui %7 : i1 to i32
    %c0_i32_5 = arith.constant 0 : i32
    %9 = arith.cmpi ne, %8, %c0_i32_5 : i32
    scf.if %9 {
      %16 = tpu.iota {dimensions = array<i32: 1>} : vector<2x128xi32>
      %c128_i32 = arith.constant 128 : i32
      %17 = arith.muli %arg1, %c128_i32 : i32
      %18 = vector.broadcast %17 : i32 to vector<2x128xi32>
      %19 = arith.addi %18, %16 : vector<2x128xi32>
      %c48_i32 = arith.constant 48 : i32
      %20 = vector.broadcast %c48_i32 : i32 to vector<2x128xi32>
      %21 = arith.cmpi slt, %19, %20 : vector<2x128xi32>
      %c0_10 = arith.constant 0 : index
      %c0_11 = arith.constant 0 : index
      %22 = vector.load %arg6[%c0_10, %c0_11] : memref<2x128xf32, #tpu.memory_space<vmem>>, vector<2x128xf32>
      %cst = arith.constant 0.000000e+00 : f32
      %23 = vector.broadcast %cst : f32 to vector<2x128xf32>
      %24 = arith.select %21, %6, %23 : vector<2x128xi1>, vector<2x128xf32>
      %25 = arith.addf %22, %24 : vector<2x128xf32>
      %c0_12 = arith.constant 0 : index
      %c0_13 = arith.constant 0 : index
      %26 = vector.load %arg6[%c0_12, %c0_13] : memref<2x128xf32, #tpu.memory_space<vmem>>, vector<2x128xf32>
      tpu.vector_store %arg6[%c0_12, %c0_13], %25 {strides = array<i32>} : memref<2x128xf32, #tpu.memory_space<vmem>>, vector<2x128xf32>,
    } else {
    }
    %c0_i32_6 = arith.constant 0 : i32
    %10 = arith.cmpi ne, %arg1, %c0_i32_6 : i32
    %11 = arith.extui %10 : i1 to i32
    %c0_i32_7 = arith.constant 0 : i32
    %12 = arith.cmpi ne, %11, %c0_i32_7 : i32
    scf.if %12 {
      %c0_10 = arith.constant 0 : index
      %c0_11 = arith.constant 0 : index
      %16 = vector.load %arg6[%c0_10, %c0_11] : memref<2x128xf32, #tpu.memory_space<vmem>>, vector<2x128xf32>
      %17 = arith.addf %16, %6 : vector<2x128xf32>
      %c0_12 = arith.constant 0 : index
      %c0_13 = arith.constant 0 : index
      %18 = vector.load %arg6[%c0_12, %c0_13] : memref<2x128xf32, #tpu.memory_space<vmem>>, vector<2x128xf32>
      tpu.vector_store %arg6[%c0_12, %c0_13], %17 {strides = array<i32>} : memref<2x128xf32, #tpu.memory_space<vmem>>, vector<2x128xf32>,
    } else {
    }
    %c0_i32_8 = arith.constant 0 : i32
    %13 = arith.cmpi eq, %arg1, %c0_i32_8 : i32
    %14 = arith.extui %13 : i1 to i32
    %c0_i32_9 = arith.constant 0 : i32
    %15 = arith.cmpi ne, %14, %c0_i32_9 : i32
    scf.if %15 {
      %c0_10 = arith.constant 0 : index
      %c0_11 = arith.constant 0 : index
      %16 = vector.load %arg6[%c0_10, %c0_11] : memref<2x128xf32, #tpu.memory_space<vmem>>, vector<2x128xf32>
      %cst = arith.constant dense<0.000000e+00> : vector<2xf32>
      %17 = vector.multi_reduction <add>, %16, %cst [1] : vector<2x128xf32> to vector<2xf32>
      %18 = vector.shape_cast %17 : vector<2xf32> to vector<2x1xf32>
      %19 = math.sqrt %18 : vector<2x1xf32>
      %c0_12 = arith.constant 0 : index
      %c0_13 = arith.constant 0 : index
      %20 = vector.load %arg4[%c0_12, %c0_13] : memref<2x1xf32, #tpu.memory_space<vmem>>, vector<2x1xf32>
      %21 = arith.mulf %19, %20 : vector<2x1xf32>
      %c0_14 = arith.constant 0 : index
      %c0_15 = arith.constant 0 : index
      %22 = vector.load %arg5[%c0_14, %c0_15] : memref<2x1xf32, #tpu.memory_space<vmem>>, vector<2x1xf32>
      tpu.vector_store %arg5[%c0_14, %c0_15], %21 {strides = array<i32>} : memref<2x1xf32, #tpu.memory_space<vmem>>, vector<2x1xf32>,
    } else {
    }
    return
  }
  func.func @transform_0(%arg0: i32, %arg1: i32) -> (i32, i32) {
    %c0_i32 = arith.constant 0 : i32
    return %arg0, %arg1 : i32, i32
  }
  func.func @transform_1(%arg0: i32, %arg1: i32) -> (i32, i32) {
    %c0_i32 = arith.constant 0 : i32
    return %arg0, %arg1 : i32, i32
  }
  func.func @transform_2(%arg0: i32, %arg1: i32) -> (i32, i32) {
    %c0_i32 = arith.constant 0 : i32
    %c0_i32_0 = arith.constant 0 : i32
    return %arg0, %c0_i32 : i32, i32
  }
  func.func @transform_3(%arg0: i32, %arg1: i32) -> (i32, i32) {
    %c0_i32 = arith.constant 0 : i32
    %c0_i32_0 = arith.constant 0 : i32
    return %arg0, %c0_i32 : i32, i32
  }
}

</mosaic_0001>

<llo_original>
// kernel: tpu_custom_call.1
$region0: #{tpu_custom_call.1}
  #allocation0 [shape = 'u32[]', space=smem, size = 0x4, offset = 0x4, fixed_abs, tag = 'smem constant byte address 0x4 - core index']
  #allocation1 [shape = 'u32[144,128]{1,0:T(1,128)}', space=vmem, size = 0x12000, scoped, tag = 'internal scratch']
  #allocation2 [shape = 'f32[2,128]{1,0:T(2,128)}', space=vmem, size = 0x400, scoped, tag = 'scratch operand']
  %s0 = inlined_call_operand.vmem [shape: f32[2,48], index: 0, kind: input, shape index: {}]
  %s1 = inlined_call_operand.vmem [shape: f32[2,48], index: 1, kind: input, shape index: {}]
  %s2 = inlined_call_operand.vmem [shape: f32[2,1], index: 2, kind: input, shape index: {}]
  %s3 = inlined_call_operand.vmem [shape: f32[2,1], index: 3, kind: output, shape index: {}]
  %s4 = sld [smem:[#allocation0]]
  $region38: #{tpu_custom_call.1} parent=0
    _
  %s6 = ssub.s32 1, %s4
  %s7 = scalar_select 0, %s6, %s4
  // Predicated region
  $region2: #{tpu_custom_call.1} parent=0 // pred_check
    _
  $region3: #{tpu_custom_call.1} parent=0 // pred_check_branch
    %9 = sbr.rel (0) target = $region5
  $region4: #{tpu_custom_call.1} parent=0 // pred_region
    _
  $region5: #{tpu_custom_call.1} parent=0 // pred_fallthru
    _
  // Predicated region
  $region6: #{tpu_custom_call.1} parent=0 // pred_check
    _
  $region7: #{tpu_custom_call.1} parent=0 // pred_check_branch
    %11 = sbr.rel (0) target = $region9
  $region8: #{tpu_custom_call.1} parent=0 // pred_region
    _
  $region9: #{tpu_custom_call.1} parent=0 // pred_fallthru
    _
  // Predicated region
  $region10: #{tpu_custom_call.1} parent=0 // pred_check
    _
  $region11: #{tpu_custom_call.1} parent=0 // pred_check_branch
    %13 = sbr.rel (0) target = $region13
  $region12: #{tpu_custom_call.1} parent=0 // pred_region
    _
  $region13: #{tpu_custom_call.1} parent=0 // pred_fallthru
    _
  %p14 = scmp.eq.s32.totalorder 0, 0
  // Predicated region
  $region14: #{tpu_custom_call.1} parent=0 // pred_check
    %p15 = pneg %p14
  $region15: #{tpu_custom_call.1} parent=0 // pred_check_branch
    %17 = sbr.rel (%p15) target = $region17
  $region16: #{tpu_custom_call.1} parent=0 // pred_region
    %18 = vst [vmem:[#allocation2] sm:$0x3] 0.0
  $region17: #{tpu_custom_call.1} parent=0 // pred_fallthru
    _
  %v19 = vld [vmem:[%s0] sm:$0x3]
  %v20 = vld [vmem:[%s1] sm:$0x3]
  %v21 = vsub.f32 %v19, %v20
  %v22 = vmul.f32 %v21, %v21
  // Predicated region
  $region18: #{tpu_custom_call.1} parent=0 // pred_check
    %p23 = pneg %p14
  $region19: #{tpu_custom_call.1} parent=0 // pred_check_branch
    %25 = sbr.rel (%p23) target = $region21
  $region20: #{tpu_custom_call.1} parent=0 // pred_region
    %v26 = vlaneseq
    %v27 = vand.u32 %v26, 127
    %s28 = smul.u32 0, 128
    %v29 = vstv %s28
    %v30 = vadd.s32 %v29, %v27
    %vm31 = vcmp.lt.s32.totalorder %v30, 48
    %v32 = vld [vmem:[#allocation2] sm:$0x3]
    %v33 = vsel %vm31, %v22, 0.0
    %v34 = vadd.f32 %v32, %v33
    %35 = vst [vmem:[#allocation2] sm:$0x3] %v34
  $region21: #{tpu_custom_call.1} parent=0 // pred_fallthru
    _
  %p36 = scmp.ne.s32.totalorder 0, 0
  // Predicated region
  $region22: #{tpu_custom_call.1} parent=0 // pred_check
    %p37 = pneg %p36
  $region23: #{tpu_custom_call.1} parent=0 // pred_check_branch
    %39 = sbr.rel (%p37) target = $region25
  $region24: #{tpu_custom_call.1} parent=0 // pred_region
    %v40 = vld [vmem:[#allocation2] sm:$0x3]
    %v41 = vadd.f32 %v40, %v22
    %42 = vst [vmem:[#allocation2] sm:$0x3] %v41
  $region25: #{tpu_custom_call.1} parent=0 // pred_fallthru
    _
  // Predicated region
  $region26: #{tpu_custom_call.1} parent=0 // pred_check
    %p43 = pneg %p14
  $region27: #{tpu_custom_call.1} parent=0 // pred_check_branch
    %45 = sbr.rel (%p43) target = $region29
  $region28: #{tpu_custom_call.1} parent=0 // pred_region
    %v46 = vld [vmem:[#allocation2] sm:$0x3]
    %vm47 = vcmask 1041408
    %v48 = vsel %vm47, %v46, 0.0
    %49 = vadd.xlane.f32.xlu0 %v48
    %v50 = vpop.xlane.xlu0 %49
    %v51 = vrsqrt.pop %v50
    %v52 = vmul.f32 %v50, %v51
    %vm53 = vcmp.eq.f32.partialorder %v50, inf
    %v54 = vsel %vm53, %v50, %v52
    %vm55 = vcmp.eq.f32.partialorder %v50, 0.0
    %v56 = vand.u32 %v50, 2147483648
    %v57 = vsel %vm55, %v56, %v54
    %v58 = vld [vmem:[%s2] sm:$0x3]
    %v59 = vmul.f32 %v57, %v58
    %vm60 = vcmask 1024
    %61 = vst.msk [vmem:[%s3] sm:$0x3] %vm60, %v59
  $region29: #{tpu_custom_call.1} parent=0 // pred_fallthru
    _
  // Predicated region
  $region30: #{tpu_custom_call.1} parent=0 // pred_check
    _
  $region31: #{tpu_custom_call.1} parent=0 // pred_check_branch
    %63 = sbr.rel (0) target = $region33
  $region32: #{tpu_custom_call.1} parent=0 // pred_region
    _
  $region33: #{tpu_custom_call.1} parent=0 // pred_fallthru
    _
  // Predicated region
  $region34: #{tpu_custom_call.1} parent=0 // pred_check
    _
  $region35: #{tpu_custom_call.1} parent=0 // pred_check_branch
    %65 = sbr.rel (0) target = $region37
  $region36: #{tpu_custom_call.1} parent=0 // pred_region
    _
  $region37: #{tpu_custom_call.1} parent=0 // pred_fallthru
    _

</llo_original>
